<compile_context>
chip_gen: v7x
topology: tpu7x:2x2x1
jax: 0.10.0
libtpu: 0.0.40
codegen_flags: <defaults>
</compile_context>

<pallas_src>
import functools
import math

import jax
import jax.numpy as jnp
from jax.experimental import pallas as pl
from jax.experimental.pallas import tpu as pltpu

LANES = 128
ACC_ROWS = 32        # (32,128) f32 vector accumulator: 4 independent (8,128) vreg chains
ROW_TILE_MAX = 4096  # (4096,128) f32 block = 2 MiB; 2 inputs x 2 pipeline bufs = 8 MiB VMEM


def _cdiv(a, b):
    return -(-a // b)


def _round_up(x, m):
    return _cdiv(x, m) * m


def _kl_partial_kernel(p1_ref, p2_ref, out_ref, acc_ref, *,
                       rows, row_tile, steps, needs_mask):
    s = pl.program_id(0)
    j = pl.program_id(1)

    @pl.when(j == 0)
    def _():
        acc_ref[...] = jnp.zeros_like(acc_ref)

    # Upcast in VMEM: inputs are streamed in their native dtype (bf16 halves HBM bytes).
    p1 = p1_ref[...].astype(jnp.float32)          # (row_tile, 128)
    p2 = p2_ref[...].astype(jnp.float32)

    if needs_mask:
        # Mask built from the *unclamped* block position: rows past the array end (partial
        # tail block AND whole duplicated blocks from the clamped index_map) are replaced
        # with 1.0 BEFORE the logs, so garbage/NaN fill never reaches the sum and nothing
        # is double-counted.  `rows`, `row_tile`, `steps` are Python ints (static).
        row_start = (s * steps + j) * row_tile
        valid = jnp.clip(rows - row_start, 0, row_tile)
        row_ids = jax.lax.broadcasted_iota(jnp.int32, (row_tile, LANES), 0)
        keep = row_ids < valid
        one = jnp.float32(1.0)
        p1 = jnp.where(keep, p1, one)
        p2 = jnp.where(keep, p2, one)

    # KLDivLoss(log_target=True) pointwise term: exp(t)*(t - i) = p2*(log p2 - log p1).
    term = p2 * (jnp.log(p2) - jnp.log(p1))

    # Fold rows into the (32,128) accumulator: pure VPU adds, no per-step XLU reduce,
    # and 4 independent accumulation chains instead of one long dependent chain.
    acc_ref[...] += jnp.sum(term.reshape(-1, ACC_ROWS, LANES), axis=0)

    @pl.when(j == pl.num_programs(1) - 1)
    def _():
        out_ref[...] = acc_ref[...]


def _choose_tiling(rows):
    # 2 shards whenever there are >= 2 accumulator tiles of work (v7x dual-TC; a harmless
    # sequential loop on v5e/v6e), then balance the row tile so masked/duplicate waste
    # stays at <= one 32-row granule per shard (not row_tile*num_shards granularity).
    num_shards = 2 if rows >= 2 * ACC_ROWS else 1
    per_shard = _cdiv(rows, num_shards)
    k = max(1, _cdiv(per_shard, ROW_TILE_MAX))
    row_tile = max(ACC_ROWS, _round_up(_cdiv(rows, num_shards * k), ACC_ROWS))
    total_blocks = _cdiv(rows, row_tile)
    steps = _cdiv(total_blocks, num_shards)
    return row_tile, num_shards, steps, total_blocks


@functools.partial(jax.jit, static_argnames=("temperature",))
def consistency_loss(predictions1, predictions2, temperature=0.1):
    # `temperature` is unused in the PyTorch forward; kept for API parity.
    assert predictions1.shape == predictions2.shape
    n_total = math.prod(predictions1.shape)

    lane_pad = (-n_total) % LANES
    rows = (n_total + lane_pad) // LANES

    def _prep(x):
        x = x.reshape(-1)
        if lane_pad:
            # Ragged sizes only: minimal 1.0 pad to a lane multiple (contributes exactly 0).
            x = jnp.concatenate([x, jnp.ones((lane_pad,), x.dtype)])
        # Free (bitcast) reshape when n_total % 128 == 0: no extra HBM traffic.
        return x.reshape(rows, LANES)

    p1_2d = _prep(predictions1)
    p2_2d = _prep(predictions2)

    row_tile, num_shards, steps, total_blocks = _choose_tiling(rows)
    needs_mask = (num_shards * steps * row_tile) != rows

    # Clamp the block index so no DMA ever starts past the array end; duplicated blocks are
    # fully zeroed by the in-kernel mask (computed from the unclamped position).
    in_map = lambda s, j: (jnp.minimum(s * steps + j, total_blocks - 1), 0)

    kernel = functools.partial(
        _kl_partial_kernel,
        rows=rows, row_tile=row_tile, steps=steps, needs_mask=needs_mask)

    bytes_in = (n_total * jnp.dtype(predictions1.dtype).itemsize
                + n_total * jnp.dtype(predictions2.dtype).itemsize)

    partial_sums = pl.pallas_call(
        kernel,
        out_shape=jax.ShapeDtypeStruct((num_shards, ACC_ROWS, LANES), jnp.float32),
        grid_spec=pltpu.PrefetchScalarGridSpec(
            num_scalar_prefetch=0,
            grid=(num_shards, steps),
            in_specs=[
                pl.BlockSpec((row_tile, LANES), in_map),
                pl.BlockSpec((row_tile, LANES), in_map),
            ],
            # Shard-resident (32,128) partial-sum block; squeezed shard dim inside the kernel.
            out_specs=pl.BlockSpec((None, ACC_ROWS, LANES), lambda s, j: (s, 0, 0)),
            scratch_shapes=[pltpu.VMEM((ACC_ROWS, LANES), jnp.float32)],
        ),
        compiler_params=pltpu.CompilerParams(
            # Shard axis parallel (v7x dual-TC), reduction axis arbitrary (output resident).
            dimension_semantics=("parallel", "arbitrary"),
            vmem_limit_bytes=32 * 1024 * 1024,
        ),
        cost_estimate=pl.CostEstimate(
            flops=5 * n_total,
            transcendentals=2 * n_total,
            bytes_accessed=bytes_in + num_shards * ACC_ROWS * LANES * 4,
        ),
    )(p1_2d, p2_2d)

    # Final tiny reduce (num_shards * 32 * 128 elements) + 'mean' scaling.
    return jnp.sum(partial_sums) * jnp.float32(1.0 / n_total)


def consistency_loss_ref(p1, p2):
    # Pure-JAX reference of nn.KLDivLoss(reduction='mean', log_target=True)(p1.log(), p2.log()).
    p1 = p1.astype(jnp.float32)
    p2 = p2.astype(jnp.float32)
    return jnp.mean(p2 * (jnp.log(p2) - jnp.log(p1)))


if __name__ == "__main__":
    key = jax.random.PRNGKey(0)
    k1, k2, k3, k4, k5, k6 = jax.random.split(key, 6)

    # Case 1: NCHW shape, numel % 128 == 0 (zero-copy reshape + masked partial tail block).
    B, C, H, W = 2, 4, 16, 16
    predictions1 = jax.nn.softmax(jax.random.normal(k1, (B, C, H, W), jnp.float32), axis=1)
    predictions2 = jax.nn.softmax(jax.random.normal(k2, (B, C, H, W), jnp.float32), axis=1)
    loss = jax.block_until_ready(consistency_loss(predictions1, predictions2))
    ref = consistency_loss_ref(predictions1, predictions2)
    assert jnp.allclose(loss, ref, rtol=1e-5, atol=1e-6), (loss, ref)

    # Case 2: ragged shape (exercises the minimal 1.0 lane-pad path + in-kernel mask).
    q1 = jax.nn.softmax(jax.random.normal(k3, (3, 5, 7, 11), jnp.float32), axis=1)
    q2 = jax.nn.softmax(jax.random.normal(k4, (3, 5, 7, 11), jnp.float32), axis=1)
    loss2 = jax.block_until_ready(consistency_loss(q1, q2))
    ref2 = consistency_loss_ref(q1, q2)
    assert jnp.allclose(loss2, ref2, rtol=1e-5, atol=1e-6), (loss2, ref2)

    # Case 3: bf16 inputs, larger shape (exercises native-dtype streaming + 2-shard grid).
    r1 = jax.nn.softmax(jax.random.normal(k5, (4, 8, 64, 64), jnp.float32), axis=1).astype(jnp.bfloat16)
    r2 = jax.nn.softmax(jax.random.normal(k6, (4, 8, 64, 64), jnp.float32), axis=1).astype(jnp.bfloat16)
    loss3 = jax.block_until_ready(consistency_loss(r1, r2))
    ref3 = consistency_loss_ref(r1, r2)
    assert jnp.allclose(loss3, ref3, rtol=1e-4, atol=1e-6), (loss3, ref3)

    print("KERNEL_OK")
</pallas_src>

<mosaic_0001>
module attributes {stable_mosaic.version = 11 : i64} {
  func.func @_kl_partial_kernel(%arg0: i32, %arg1: i32, %arg2: memref<32x128xf32, #tpu.memory_space<vmem>>, %arg3: memref<32x128xf32, #tpu.memory_space<vmem>>, %arg4: memref<1x32x128xf32, #tpu.memory_space<vmem>>, %arg5: memref<32x128xf32, #tpu.memory_space<vmem>>) attributes {dimension_semantics = [#tpu.dimension_semantics<parallel>, #tpu.dimension_semantics<arbitrary>], iteration_bounds = array<i64: 1, 1>, scalar_prefetch = 0 : i64, scratch_operands = 1 : i64, tpu.core_type = #tpu.core_type<tc>, window_params = [{transform_indices = @transform_0, window_bounds = array<i64: 32, 128>}, {transform_indices = @transform_1, window_bounds = array<i64: 32, 128>}, {transform_indices = @transform_2, window_bounds = array<i64: 1, 32, 128>}]} {
    %c0_i32 = arith.constant 0 : i32
    %0 = arith.cmpi eq, %arg1, %c0_i32 : i32
    %1 = arith.extui %0 : i1 to i32
    %c0_i32_0 = arith.constant 0 : i32
    %2 = arith.cmpi ne, %1, %c0_i32_0 : i32
    scf.if %2 {
      %cst_14 = arith.constant 0.000000e+00 : f32
      %30 = vector.broadcast %cst_14 : f32 to vector<32x128xf32>
      %c0_15 = arith.constant 0 : index
      %c0_16 = arith.constant 0 : index
      %31 = vector.load %arg5[%c0_15, %c0_16] : memref<32x128xf32, #tpu.memory_space<vmem>>, vector<32x128xf32>
      tpu.vector_store %arg5[%c0_15, %c0_16], %30 {strides = array<i32>} : memref<32x128xf32, #tpu.memory_space<vmem>>, vector<32x128xf32>,
    } else {
    }
    %c0 = arith.constant 0 : index
    %c0_1 = arith.constant 0 : index
    %3 = vector.load %arg2[%c0, %c0_1] : memref<32x128xf32, #tpu.memory_space<vmem>>, vector<32x128xf32>
    %c0_2 = arith.constant 0 : index
    %c0_3 = arith.constant 0 : index
    %4 = vector.load %arg3[%c0_2, %c0_3] : memref<32x128xf32, #tpu.memory_space<vmem>>, vector<32x128xf32>
    %c1_i32 = arith.constant 1 : i32
    %5 = arith.muli %arg0, %c1_i32 : i32
    %6 = arith.addi %5, %arg1 : i32
    %c32_i32 = arith.constant 32 : i32
    %7 = arith.muli %6, %c32_i32 : i32
    %c16_i32 = arith.constant 16 : i32
    %8 = arith.subi %c16_i32, %7 : i32
    %c0_i32_4 = arith.constant 0 : i32
    %c32_i32_5 = arith.constant 32 : i32
    %9 = arith.maxsi %c0_i32_4, %8 : i32
    %10 = arith.minsi %c32_i32_5, %9 : i32
    %11 = tpu.iota {dimensions = array<i32: 0>} : vector<32x128xi32>
    %12 = vector.broadcast %10 : i32 to vector<32x128xi32>
    %13 = arith.cmpi slt, %11, %12 : vector<32x128xi32>
    %cst = arith.constant 1.000000e+00 : f32
    %14 = vector.broadcast %cst : f32 to vector<32x128xf32>
    %15 = arith.select %13, %3, %14 : vector<32x128xi1>, vector<32x128xf32>
    %cst_6 = arith.constant 1.000000e+00 : f32
    %16 = vector.broadcast %cst_6 : f32 to vector<32x128xf32>
    %17 = arith.select %13, %4, %16 : vector<32x128xi1>, vector<32x128xf32>
    %18 = math.log %17 : vector<32x128xf32>
    %19 = math.log %15 : vector<32x128xf32>
    %20 = arith.subf %18, %19 : vector<32x128xf32>
    %21 = arith.mulf %17, %20 : vector<32x128xf32>
    %c0_7 = arith.constant 0 : index
    %c0_8 = arith.constant 0 : index
    %22 = vector.load %arg5[%c0_7, %c0_8] : memref<32x128xf32, #tpu.memory_space<vmem>>, vector<32x128xf32>
    %23 = vector.shape_cast %21 : vector<32x128xf32> to vector<1x32x128xf32>
    %cst_9 = arith.constant dense<0.000000e+00> : vector<32x128xf32>
    %24 = vector.multi_reduction <add>, %23, %cst_9 [0] : vector<1x32x128xf32> to vector<32x128xf32>
    %25 = arith.addf %22, %24 : vector<32x128xf32>
    %c0_10 = arith.constant 0 : index
    %c0_11 = arith.constant 0 : index
    %26 = vector.load %arg5[%c0_10, %c0_11] : memref<32x128xf32, #tpu.memory_space<vmem>>, vector<32x128xf32>
    tpu.vector_store %arg5[%c0_10, %c0_11], %25 {strides = array<i32>} : memref<32x128xf32, #tpu.memory_space<vmem>>, vector<32x128xf32>,
    %c0_i32_12 = arith.constant 0 : i32
    %27 = arith.cmpi eq, %arg1, %c0_i32_12 : i32
    %28 = arith.extui %27 : i1 to i32
    %c0_i32_13 = arith.constant 0 : i32
    %29 = arith.cmpi ne, %28, %c0_i32_13 : i32
    scf.if %29 {
      %c0_14 = arith.constant 0 : index
      %c0_15 = arith.constant 0 : index
      %30 = vector.load %arg5[%c0_14, %c0_15] : memref<32x128xf32, #tpu.memory_space<vmem>>, vector<32x128xf32>
      %c0_16 = arith.constant 0 : index
      %c0_17 = arith.constant 0 : index
      %c0_18 = arith.constant 0 : index
      %31 = vector.load %arg4[%c0_16, %c0_17, %c0_18] : memref<1x32x128xf32, #tpu.memory_space<vmem>>, vector<1x32x128xf32>
      %32 = vector.shape_cast %31 : vector<1x32x128xf32> to vector<32x128xf32>
      %33 = vector.shape_cast %30 : vector<32x128xf32> to vector<1x32x128xf32>
      tpu.vector_store %arg4[%c0_16, %c0_17, %c0_18], %33 {strides = array<i32>} : memref<1x32x128xf32, #tpu.memory_space<vmem>>, vector<1x32x128xf32>,
    } else {
    }
    return
  }
  func.func @transform_0(%arg0: i32, %arg1: i32) -> (i32, i32) {
    %c1_i32 = arith.constant 1 : i32
    %0 = arith.muli %arg0, %c1_i32 : i32
    %1 = arith.addi %0, %arg1 : i32
    %c0_i32 = arith.constant 0 : i32
    %2 = arith.minsi %1, %c0_i32 : i32
    %c0_i32_0 = arith.constant 0 : i32
    %c0_i32_1 = arith.constant 0 : i32
    return %2, %c0_i32_0 : i32, i32
  }
  func.func @transform_1(%arg0: i32, %arg1: i32) -> (i32, i32) {
    %c1_i32 = arith.constant 1 : i32
    %0 = arith.muli %arg0, %c1_i32 : i32
    %1 = arith.addi %0, %arg1 : i32
    %c0_i32 = arith.constant 0 : i32
    %2 = arith.minsi %1, %c0_i32 : i32
    %c0_i32_0 = arith.constant 0 : i32
    %c0_i32_1 = arith.constant 0 : i32
    return %2, %c0_i32_0 : i32, i32
  }
  func.func @transform_2(%arg0: i32, %arg1: i32) -> (i32, i32, i32) {
    %c0_i32 = arith.constant 0 : i32
    %c0_i32_0 = arith.constant 0 : i32
    %c0_i32_1 = arith.constant 0 : i32
    return %arg0, %c0_i32, %c0_i32_0 : i32, i32, i32
  }
}

</mosaic_0001>

<llo_original>
// kernel: consistency_loss.1
$region0: #{consistency_loss.1}
  #allocation0 [shape = 'u32[]', space=smem, size = 0x4, offset = 0x4, fixed_abs, tag = 'smem constant byte address 0x4 - core index']
  #allocation1 [shape = 'u32[144,128]{1,0:T(1,128)}', space=vmem, size = 0x12000, scoped, tag = 'internal scratch']
  #allocation2 [shape = 'f32[32,128]{1,0:T(8,128)}', space=vmem, size = 0x4000, scoped, tag = 'scratch operand']
  %s0 = inlined_call_operand.vmem [shape: f32[16,128], index: 0, kind: input, shape index: {}]
  %s1 = inlined_call_operand.vmem [shape: f32[16,128], index: 1, kind: input, shape index: {}]
  %s2 = inlined_call_operand.vmem [shape: f32[1,32,128], index: 2, kind: output, shape index: {}]
  %s3 = sld [smem:[#allocation0]]
  $region26: #{consistency_loss.1} parent=0
    _
  %s5 = ssub.s32 1, %s3
  %s6 = scalar_select 0, %s5, %s3
  // Predicated region
  $region2: #{consistency_loss.1} parent=0 // pred_check
    _
  $region3: #{consistency_loss.1} parent=0 // pred_check_branch
    %8 = sbr.rel (0) target = $region5
  $region4: #{consistency_loss.1} parent=0 // pred_region
    %s9 = sadd.s32 0, 0
    %p10 = scmp.lt.s32.totalorder %s9, 0
    %s11 = scalar_select %p10, %s9, 0
    %s12 = smul.u32 4, %s11
    %s13 = ssub.s32 2, %s12
    %s14 = smul.u32 128, %s13
    %p15 = scmp.lt.s32.totalorder %s12, 1
    %s16 = scalar_select %p15, %s12, 1
    %s17 = smul.addr %s16, 8
    %s18 = scalar_lea.vmem %s0, %s17
    %s19 = sadd.s32 0, 0
    %p20 = scmp.lt.s32.totalorder %s19, 0
    %s21 = scalar_select %p20, %s19, 0
    %s22 = smul.u32 4, %s21
    %s23 = ssub.s32 2, %s22
    %s24 = smul.u32 128, %s23
  $region5: #{consistency_loss.1} parent=0 // pred_fallthru
    _
  // Predicated region
  $region6: #{consistency_loss.1} parent=0 // pred_check
    _
  $region7: #{consistency_loss.1} parent=0 // pred_check_branch
    %26 = sbr.rel (0) target = $region9
  $region8: #{consistency_loss.1} parent=0 // pred_region
    %s27 = sadd.s32 0, 0
    %p28 = scmp.lt.s32.totalorder %s27, 0
    %s29 = scalar_select %p28, %s27, 0
    %s30 = smul.u32 4, %s29
    %s31 = ssub.s32 2, %s30
    %s32 = smul.u32 128, %s31
    %p33 = scmp.lt.s32.totalorder %s30, 1
    %s34 = scalar_select %p33, %s30, 1
    %s35 = smul.addr %s34, 8
    %s36 = scalar_lea.vmem %s1, %s35
    %s37 = sadd.s32 0, 0
    %p38 = scmp.lt.s32.totalorder %s37, 0
    %s39 = scalar_select %p38, %s37, 0
    %s40 = smul.u32 4, %s39
    %s41 = ssub.s32 2, %s40
    %s42 = smul.u32 128, %s41
  $region9: #{consistency_loss.1} parent=0 // pred_fallthru
    _
  %s43 = sadd.s32 0, 0
  %p44 = scmp.lt.s32.totalorder %s43, 0
  %s45 = scalar_select %p44, %s43, 0
  %s46 = smul.u32 4, %s45
  %s47 = ssub.s32 2, %s46
  %s48 = smul.u32 128, %s47
  %p49 = scmp.lt.s32.totalorder %s46, 1
  %s50 = scalar_select %p49, %s46, 1
  %s51 = smul.addr %s50, 8
  %s52 = scalar_lea.vmem %s0, %s51
  %s53 = sadd.s32 0, 0
  %p54 = scmp.lt.s32.totalorder %s53, 0
  %s55 = scalar_select %p54, %s53, 0
  %s56 = smul.u32 4, %s55
  %s57 = ssub.s32 2, %s56
  %s58 = smul.u32 128, %s57
  %p59 = scmp.lt.s32.totalorder %s56, 1
  %s60 = scalar_select %p59, %s56, 1
  %s61 = smul.addr %s60, 8
  %s62 = scalar_lea.vmem %s1, %s61
  %s63 = sadd.s32 0, 0
  %p64 = scmp.lt.s32.totalorder %s63, 0
  %s65 = scalar_select %p64, %s63, 0
  %s66 = smul.u32 4, %s65
  %s67 = ssub.s32 2, %s66
  %s68 = smul.u32 128, %s67
  %p69 = scmp.lt.s32.totalorder %s66, 1
  %s70 = scalar_select %p69, %s66, 1
  %s71 = smul.addr %s70, 8
  %s72 = scalar_lea.vmem %s0, %s71
  %s73 = sadd.s32 0, 0
  %p74 = scmp.lt.s32.totalorder %s73, 0
  %s75 = scalar_select %p74, %s73, 0
  %s76 = smul.u32 4, %s75
  %s77 = ssub.s32 2, %s76
  %s78 = smul.u32 128, %s77
  %s79 = sadd.s32 0, 0
  %p80 = scmp.lt.s32.totalorder %s79, 0
  %s81 = scalar_select %p80, %s79, 0
  %s82 = smul.u32 4, %s81
  %s83 = ssub.s32 2, %s82
  %s84 = smul.u32 128, %s83
  %p85 = scmp.lt.s32.totalorder %s82, 1
  %s86 = scalar_select %p85, %s82, 1
  %s87 = smul.addr %s86, 8
  %s88 = scalar_lea.vmem %s1, %s87
  %s89 = sadd.s32 0, 0
  %p90 = scmp.lt.s32.totalorder %s89, 0
  %s91 = scalar_select %p90, %s89, 0
  %s92 = smul.u32 4, %s91
  %s93 = ssub.s32 2, %s92
  %s94 = smul.u32 128, %s93
  %p95 = scmp.eq.s32.totalorder 0, 0
  // Predicated region
  $region10: #{consistency_loss.1} parent=0 // pred_check
    %p96 = pneg %p95
  $region11: #{consistency_loss.1} parent=0 // pred_check_branch
    %98 = sbr.rel (%p96) target = $region13
  $region12: #{consistency_loss.1} parent=0 // pred_region
    %99 = vst [vmem:[#allocation2] sm:$0xff] 0.0
    %100 = vst [vmem:[#allocation2 + $0x8] sm:$0xff] 0.0
    %101 = vst [vmem:[#allocation2 + $0x10] sm:$0xff] 0.0
    %102 = vst [vmem:[#allocation2 + $0x18] sm:$0xff] 0.0
  $region13: #{consistency_loss.1} parent=0 // pred_fallthru
    _
  %v103 = vld [vmem:[%s72] sm:$0xff]
  %v104 = vld [vmem:[%s72 + $0x8] sm:$0xff]
  %v105 = vld [vmem:[%s72 + $0x10] sm:$0xff]
  %v106 = vld [vmem:[%s72 + $0x18] sm:$0xff]
  %v107 = vld [vmem:[%s88] sm:$0xff]
  %v108 = vld [vmem:[%s88 + $0x8] sm:$0xff]
  %v109 = vld [vmem:[%s88 + $0x10] sm:$0xff]
  %v110 = vld [vmem:[%s88 + $0x18] sm:$0xff]
  %s111 = sadd.s32 0, 0
  %s112 = smul.u32 %s111, 32
  %s113 = ssub.s32 16, %s112
  %p114 = scmp.gt.s32.totalorder %s113, 0
  %s115 = scalar_select %p114, %s113, 0
  %p116 = scmp.lt.s32.totalorder %s115, 32
  %s117 = scalar_select %p116, %s115, 32
  %v118 = vlaneseq
  %v119 = vshrl.u32 %v118, 7
  %v120 = vadd.s32 %v119, 8
  %v121 = vadd.s32 %v119, 16
  %v122 = vadd.s32 %v119, 24
  %v123 = vstv %s117
  %vm124 = vcmp.lt.s32.totalorder %v119, %v123
  %vm125 = vcmp.lt.s32.totalorder %v120, %v123
  %vm126 = vcmp.lt.s32.totalorder %v121, %v123
  %vm127 = vcmp.lt.s32.totalorder %v122, %v123
  %v128 = vsel %vm124, %v103, 1.0
  %v129 = vsel %vm125, %v104, 1.0
  %v130 = vsel %vm126, %v105, 1.0
  %v131 = vsel %vm127, %v106, 1.0
  %v132 = vsel %vm124, %v107, 1.0
  %v133 = vsel %vm125, %v108, 1.0
  %v134 = vsel %vm126, %v109, 1.0
  %v135 = vsel %vm127, %v110, 1.0
  %v136 = vlog2.pop %v132
  %v137 = vmul.f32 %v136, 0.6931472
  %v138 = vlog2.pop %v133
  %v139 = vmul.f32 %v138, 0.6931472
  %v140 = vlog2.pop %v134
  %v141 = vmul.f32 %v140, 0.6931472
  %v142 = vlog2.pop %v135
  %v143 = vmul.f32 %v142, 0.6931472
  %v144 = vlog2.pop %v128
  %v145 = vmul.f32 %v144, 0.6931472
  %v146 = vlog2.pop %v129
  %v147 = vmul.f32 %v146, 0.6931472
  %v148 = vlog2.pop %v130
  %v149 = vmul.f32 %v148, 0.6931472
  %v150 = vlog2.pop %v131
  %v151 = vmul.f32 %v150, 0.6931472
  %v152 = vsub.f32 %v137, %v145
  %v153 = vsub.f32 %v139, %v147
  %v154 = vsub.f32 %v141, %v149
  %v155 = vsub.f32 %v143, %v151
  %v156 = vmul.f32 %v132, %v152
  %v157 = vmul.f32 %v133, %v153
  %v158 = vmul.f32 %v134, %v154
  %v159 = vmul.f32 %v135, %v155
  %v160 = vld [vmem:[#allocation2] sm:$0xff]
  %v161 = vld [vmem:[#allocation2 + $0x8] sm:$0xff]
  %v162 = vld [vmem:[#allocation2 + $0x10] sm:$0xff]
  %v163 = vld [vmem:[#allocation2 + $0x18] sm:$0xff]
  %v164 = vadd.f32 %v156, 0.0
  %v165 = vadd.f32 %v157, 0.0
  %v166 = vadd.f32 %v158, 0.0
  %v167 = vadd.f32 %v159, 0.0
  %v168 = vadd.f32 %v160, %v164
  %v169 = vadd.f32 %v161, %v165
  %v170 = vadd.f32 %v162, %v166
  %v171 = vadd.f32 %v163, %v167
  %172 = vst [vmem:[#allocation2] sm:$0xff] %v168
  %173 = vst [vmem:[#allocation2 + $0x8] sm:$0xff] %v169
  %174 = vst [vmem:[#allocation2 + $0x10] sm:$0xff] %v170
  %175 = vst [vmem:[#allocation2 + $0x18] sm:$0xff] %v171
  // Predicated region
  $region14: #{consistency_loss.1} parent=0 // pred_check
    %p176 = pneg %p95
  $region15: #{consistency_loss.1} parent=0 // pred_check_branch
    %178 = sbr.rel (%p176) target = $region17
  $region16: #{consistency_loss.1} parent=0 // pred_region
    %v179 = vld [vmem:[#allocation2] sm:$0xff]
    %v180 = vld [vmem:[#allocation2 + $0x8] sm:$0xff]
    %v181 = vld [vmem:[#allocation2 + $0x10] sm:$0xff]
    %v182 = vld [vmem:[#allocation2 + $0x18] sm:$0xff]
    %183 = vst [vmem:[%s2] sm:$0xff] %v179
    %184 = vst [vmem:[%s2 + $0x8] sm:$0xff] %v180
    %185 = vst [vmem:[%s2 + $0x10] sm:$0xff] %v181
    %186 = vst [vmem:[%s2 + $0x18] sm:$0xff] %v182
  $region17: #{consistency_loss.1} parent=0 // pred_fallthru
    _
  // Predicated region
  $region18: #{consistency_loss.1} parent=0 // pred_check
    _
  $region19: #{consistency_loss.1} parent=0 // pred_check_branch
    %188 = sbr.rel (0) target = $region21
  $region20: #{consistency_loss.1} parent=0 // pred_region
    _
  $region21: #{consistency_loss.1} parent=0 // pred_fallthru
    _
  // Predicated region
  $region22: #{consistency_loss.1} parent=0 // pred_check
    _
  $region23: #{consistency_loss.1} parent=0 // pred_check_branch
    %190 = sbr.rel (0) target = $region25
  $region24: #{consistency_loss.1} parent=0 // pred_region
    _
  $region25: #{consistency_loss.1} parent=0 // pred_fallthru
    _

</llo_original>
